<compile_context>
chip_gen: v5e
topology: v5e:2x2
jax: 0.10.0
libtpu: 0.0.40
codegen_flags: <defaults>
</compile_context>

<pallas_src>
import jax
import jax.numpy as jnp
from jax.experimental import pallas as pl
from jax.experimental.pallas import tpu as pltpu

INPUT_SIZE = 28 * 28
LANES = 128  # lane-dense output width


def _leaky_relu(x, slope=0.2):
    return jnp.where(x > 0, x, slope * x)


def _round_up(n, m):
    return ((n + m - 1) // m) * m


def discriminator_kernel(x_ref,
                         w1_ref, b1_ref,
                         w2_ref, b2_ref,
                         w3_ref, b3_ref,
                         w4_ref, b4_ref,
                         o_ref):
    """One batch tile through the whole MLP: 4 MXU matmuls, LeakyReLU on VPU."""
    # In-kernel bf16 cast (cheap VPU op hidden under the x DMA).
    x = x_ref[...].astype(jnp.bfloat16)                               # (T, 784)

    # Layer 1: bf16 MXU, f32 accumulation; bias add + LeakyReLU on f32.
    h = jnp.dot(x, w1_ref[...], preferred_element_type=jnp.float32) + b1_ref[...]
    h = _leaky_relu(h)
    # Dropout(0.4) -> identity in eval mode.

    # Layer 2.
    h = jnp.dot(h.astype(jnp.bfloat16), w2_ref[...],
                preferred_element_type=jnp.float32) + b2_ref[...]
    h = _leaky_relu(h)

    # Layer 3.
    h = jnp.dot(h.astype(jnp.bfloat16), w3_ref[...],
                preferred_element_type=jnp.float32) + b3_ref[...]
    h = _leaky_relu(h)                                                # (T, H) f32

    # Layer 4 (H -> 1), lane-dense: matmul against w4 zero-padded to (H, 128).
    # Only column 0 is meaningful; the rest is zeros and sliced off in the wrapper.
    out = jnp.dot(h, w4_ref[...], preferred_element_type=jnp.float32) + b4_ref[...]
    o_ref[...] = out.astype(o_ref.dtype)                              # (T, 128)


def init_discriminator_params(key, hidden_dim, input_size=INPUT_SIZE, output_size=1):
    """PyTorch-style init U(-1/sqrt(fan_in), 1/sqrt(fan_in)).
    Weights stored as (in, out) so the kernel does x @ W; biases as (1, out)."""
    dims = [input_size, 4 * hidden_dim, 2 * hidden_dim, hidden_dim, output_size]
    params = []
    for i in range(4):
        fan_in, fan_out = dims[i], dims[i + 1]
        key, wk, bk = jax.random.split(key, 3)
        bound = 1.0 / (fan_in ** 0.5)
        w = jax.random.uniform(wk, (fan_in, fan_out), jnp.float32, -bound, bound)
        b = jax.random.uniform(bk, (1, fan_out), jnp.float32, -bound, bound)
        params.extend([w, b])
    return params


def discriminator_forward(x, params, tile_b=1024):
    """x: any shape with trailing elements a multiple of 784 (e.g. (B,1,28,28))."""
    x2d = x.reshape(-1, INPUT_SIZE).astype(jnp.float32)   # f32 in; cast to bf16 in-kernel
    B = x2d.shape[0]

    w1, b1, w2, b2, w3, b3, w4, b4 = params

    # bf16 MXU feeds for the three wide layers (tiny arrays; cast once).
    w1b = w1.astype(jnp.bfloat16)
    w2b = w2.astype(jnp.bfloat16)
    w3b = w3.astype(jnp.bfloat16)
    # Final layer stays f32, zero-padded to 128 lanes for a lane-dense output.
    w4pad = jnp.pad(w4.astype(jnp.float32), ((0, 0), (0, LANES - 1)))   # (H, 128)
    b4pad = jnp.pad(b4.astype(jnp.float32), ((0, 0), (0, LANES - 1)))   # (1, 128)

    # Tile selection: multiple of 16, and capped so batches big enough to split
    # produce >= 2 grid steps (both v7x TensorCores under "parallel").
    half = (B + 1) // 2
    tile_b = max(16, min(tile_b, _round_up(half, 16)))
    b_pad = _round_up(B, tile_b)
    if b_pad != B:
        x2d = jnp.pad(x2d, ((0, b_pad - B), (0, 0)))   # rows are independent
    grid = (b_pad // tile_b,)

    def resident(a):
        # Full-array block, constant index_map -> DMA'd once, stays in VMEM.
        # Single-buffered: never re-fetched, so the 2nd buffer is wasted VMEM.
        return pl.BlockSpec(a.shape, lambda i: (0, 0),
                            pipeline_mode=pl.Buffered(buffer_count=1))

    out = pl.pallas_call(
        discriminator_kernel,
        out_shape=jax.ShapeDtypeStruct((b_pad, LANES), jnp.float32),
        grid_spec=pltpu.PrefetchScalarGridSpec(
            num_scalar_prefetch=0,
            grid=grid,
            in_specs=[
                pl.BlockSpec((tile_b, INPUT_SIZE), lambda i: (i, 0)),   # x tile (f32)
                resident(w1b), resident(b1),
                resident(w2b), resident(b2),
                resident(w3b), resident(b3),
                resident(w4pad), resident(b4pad),
            ],
            out_specs=pl.BlockSpec((tile_b, LANES), lambda i: (i, 0)),  # lane-dense
        ),
        compiler_params=pltpu.CompilerParams(
            dimension_semantics=("parallel",),        # megacore sharding on v7x
            vmem_limit_bytes=48 * 1024 * 1024,        # > 16/32 MiB defaults, < v7x 64 MiB
        ),
    )(x2d, w1b, b1, w2b, b2, w3b, b3, w4pad, b4pad)

    # Drop padded rows AND padded output lanes.
    return out[:B, :1]


def reference_forward(x, params):
    """Pure-JAX reference mirroring the kernel math (bf16 MXU feeds, f32 acc)."""
    x2d = x.reshape(-1, INPUT_SIZE)
    w1, b1, w2, b2, w3, b3, w4, b4 = params
    h = jnp.dot(x2d.astype(jnp.bfloat16), w1.astype(jnp.bfloat16),
                preferred_element_type=jnp.float32) + b1
    h = jnp.where(h > 0, h, 0.2 * h)
    h = jnp.dot(h.astype(jnp.bfloat16), w2.astype(jnp.bfloat16),
                preferred_element_type=jnp.float32) + b2
    h = jnp.where(h > 0, h, 0.2 * h)
    h = jnp.dot(h.astype(jnp.bfloat16), w3.astype(jnp.bfloat16),
                preferred_element_type=jnp.float32) + b3
    h = jnp.where(h > 0, h, 0.2 * h)
    return jnp.sum(h * w4.reshape(1, -1), axis=-1, keepdims=True) + b4


if __name__ == "__main__":
    key = jax.random.PRNGKey(0)
    k_x, k_p = jax.random.split(key)

    hidden_dim = 32
    batch = 2
    # Deterministic "image" input, NCHW like the PyTorch module expects.
    x = jax.random.normal(k_x, (batch, 1, 28, 28), jnp.float32)
    params = init_discriminator_params(k_p, hidden_dim)

    out = discriminator_forward(x, params)
    jax.block_until_ready(out)

    ref = reference_forward(x, params)
    assert out.shape == (batch, 1), out.shape
    assert jnp.allclose(out, ref, atol=1e-2, rtol=1e-2), "mismatch vs JAX reference"

    print("KERNEL_OK")
</pallas_src>

<mosaic_0001>
module attributes {stable_mosaic.version = 11 : i64} {
  func.func @discriminator_kernel(%arg0: i32, %arg1: memref<16x784xf32, #tpu.memory_space<vmem>>, %arg2: memref<784x128xbf16, #tpu.memory_space<vmem>>, %arg3: memref<1x128xf32, #tpu.memory_space<vmem>>, %arg4: memref<128x64xbf16, #tpu.memory_space<vmem>>, %arg5: memref<1x64xf32, #tpu.memory_space<vmem>>, %arg6: memref<64x32xbf16, #tpu.memory_space<vmem>>, %arg7: memref<1x32xf32, #tpu.memory_space<vmem>>, %arg8: memref<32x128xf32, #tpu.memory_space<vmem>>, %arg9: memref<1x128xf32, #tpu.memory_space<vmem>>, %arg10: memref<16x128xf32, #tpu.memory_space<vmem>>) attributes {dimension_semantics = [#tpu.dimension_semantics<parallel>], iteration_bounds = array<i64: 1>, scalar_prefetch = 0 : i64, scratch_operands = 0 : i64, tpu.core_type = #tpu.core_type<tc>, window_params = [{transform_indices = @transform_0, window_bounds = array<i64: 16, 784>}, {pipeline_mode = #tpu.pipeline_mode<synchronous>, transform_indices = @transform_1, window_bounds = array<i64: 784, 128>}, {pipeline_mode = #tpu.pipeline_mode<synchronous>, transform_indices = @transform_2, window_bounds = array<i64: 1, 128>}, {pipeline_mode = #tpu.pipeline_mode<synchronous>, transform_indices = @transform_3, window_bounds = array<i64: 128, 64>}, {pipeline_mode = #tpu.pipeline_mode<synchronous>, transform_indices = @transform_4, window_bounds = array<i64: 1, 64>}, {pipeline_mode = #tpu.pipeline_mode<synchronous>, transform_indices = @transform_5, window_bounds = array<i64: 64, 32>}, {pipeline_mode = #tpu.pipeline_mode<synchronous>, transform_indices = @transform_6, window_bounds = array<i64: 1, 32>}, {pipeline_mode = #tpu.pipeline_mode<synchronous>, transform_indices = @transform_7, window_bounds = array<i64: 32, 128>}, {pipeline_mode = #tpu.pipeline_mode<synchronous>, transform_indices = @transform_8, window_bounds = array<i64: 1, 128>}, {transform_indices = @transform_9, window_bounds = array<i64: 16, 128>}]} {
    %c0 = arith.constant 0 : index
    %c0_0 = arith.constant 0 : index
    %0 = vector.load %arg1[%c0, %c0_0] : memref<16x784xf32, #tpu.memory_space<vmem>>, vector<16x784xf32>
    %1 = arith.truncf %0 : vector<16x784xf32> to vector<16x784xbf16>
    %c0_1 = arith.constant 0 : index
    %c0_2 = arith.constant 0 : index
    %2 = vector.load %arg2[%c0_1, %c0_2] : memref<784x128xbf16, #tpu.memory_space<vmem>>, vector<784x128xbf16>
    %cst = arith.constant dense<0.000000e+00> : vector<16x128xf32>
    %3 = tpu.matmul %1, %2, %cst {dimension_numbers = #tpu.dot_dimension_numbers<[1], [0], [0], [1], [0, 0, 1, 1], [], []>} : vector<16x784xbf16>, vector<784x128xbf16>, vector<16x128xf32> -> vector<16x128xf32>
    %c0_3 = arith.constant 0 : index
    %c0_4 = arith.constant 0 : index
    %4 = vector.load %arg3[%c0_3, %c0_4] : memref<1x128xf32, #tpu.memory_space<vmem>>, vector<1x128xf32>
    %5 = vector.broadcast %4 : vector<1x128xf32> to vector<16x128xf32>
    %6 = arith.addf %3, %5 : vector<16x128xf32>
    %cst_5 = arith.constant 0.000000e+00 : f32
    %7 = vector.broadcast %cst_5 : f32 to vector<16x128xf32>
    %8 = arith.cmpf ogt, %6, %7 : vector<16x128xf32>
    %cst_6 = arith.constant 2.000000e-01 : f32
    %9 = vector.broadcast %cst_6 : f32 to vector<16x128xf32>
    %10 = arith.mulf %9, %6 : vector<16x128xf32>
    %11 = arith.select %8, %6, %10 : vector<16x128xi1>, vector<16x128xf32>
    %12 = arith.truncf %11 : vector<16x128xf32> to vector<16x128xbf16>
    %c0_7 = arith.constant 0 : index
    %c0_8 = arith.constant 0 : index
    %13 = vector.load %arg4[%c0_7, %c0_8] : memref<128x64xbf16, #tpu.memory_space<vmem>>, vector<128x64xbf16>
    %cst_9 = arith.constant dense<0.000000e+00> : vector<16x64xf32>
    %14 = tpu.matmul %12, %13, %cst_9 {dimension_numbers = #tpu.dot_dimension_numbers<[1], [0], [0], [1], [0, 0, 1, 1], [], []>} : vector<16x128xbf16>, vector<128x64xbf16>, vector<16x64xf32> -> vector<16x64xf32>
    %c0_10 = arith.constant 0 : index
    %c0_11 = arith.constant 0 : index
    %15 = vector.load %arg5[%c0_10, %c0_11] : memref<1x64xf32, #tpu.memory_space<vmem>>, vector<1x64xf32>
    %16 = vector.broadcast %15 : vector<1x64xf32> to vector<16x64xf32>
    %17 = arith.addf %14, %16 : vector<16x64xf32>
    %cst_12 = arith.constant 0.000000e+00 : f32
    %18 = vector.broadcast %cst_12 : f32 to vector<16x64xf32>
    %19 = arith.cmpf ogt, %17, %18 : vector<16x64xf32>
    %cst_13 = arith.constant 2.000000e-01 : f32
    %20 = vector.broadcast %cst_13 : f32 to vector<16x64xf32>
    %21 = arith.mulf %20, %17 : vector<16x64xf32>
    %22 = arith.select %19, %17, %21 : vector<16x64xi1>, vector<16x64xf32>
    %23 = arith.truncf %22 : vector<16x64xf32> to vector<16x64xbf16>
    %c0_14 = arith.constant 0 : index
    %c0_15 = arith.constant 0 : index
    %24 = vector.load %arg6[%c0_14, %c0_15] : memref<64x32xbf16, #tpu.memory_space<vmem>>, vector<64x32xbf16>
    %cst_16 = arith.constant dense<0.000000e+00> : vector<16x32xf32>
    %25 = tpu.matmul %23, %24, %cst_16 {dimension_numbers = #tpu.dot_dimension_numbers<[1], [0], [0], [1], [0, 0, 1, 1], [], []>} : vector<16x64xbf16>, vector<64x32xbf16>, vector<16x32xf32> -> vector<16x32xf32>
    %c0_17 = arith.constant 0 : index
    %c0_18 = arith.constant 0 : index
    %26 = vector.load %arg7[%c0_17, %c0_18] : memref<1x32xf32, #tpu.memory_space<vmem>>, vector<1x32xf32>
    %27 = vector.broadcast %26 : vector<1x32xf32> to vector<16x32xf32>
    %28 = arith.addf %25, %27 : vector<16x32xf32>
    %cst_19 = arith.constant 0.000000e+00 : f32
    %29 = vector.broadcast %cst_19 : f32 to vector<16x32xf32>
    %30 = arith.cmpf ogt, %28, %29 : vector<16x32xf32>
    %cst_20 = arith.constant 2.000000e-01 : f32
    %31 = vector.broadcast %cst_20 : f32 to vector<16x32xf32>
    %32 = arith.mulf %31, %28 : vector<16x32xf32>
    %33 = arith.select %30, %28, %32 : vector<16x32xi1>, vector<16x32xf32>
    %c0_21 = arith.constant 0 : index
    %c0_22 = arith.constant 0 : index
    %34 = vector.load %arg8[%c0_21, %c0_22] : memref<32x128xf32, #tpu.memory_space<vmem>>, vector<32x128xf32>
    %cst_23 = arith.constant dense<0.000000e+00> : vector<16x128xf32>
    %35 = tpu.matmul %33, %34, %cst_23 {dimension_numbers = #tpu.dot_dimension_numbers<[1], [0], [0], [1], [0, 0, 1, 1], [], []>} : vector<16x32xf32>, vector<32x128xf32>, vector<16x128xf32> -> vector<16x128xf32>
    %c0_24 = arith.constant 0 : index
    %c0_25 = arith.constant 0 : index
    %36 = vector.load %arg9[%c0_24, %c0_25] : memref<1x128xf32, #tpu.memory_space<vmem>>, vector<1x128xf32>
    %37 = vector.broadcast %36 : vector<1x128xf32> to vector<16x128xf32>
    %38 = arith.addf %35, %37 : vector<16x128xf32>
    %c0_26 = arith.constant 0 : index
    %c0_27 = arith.constant 0 : index
    %39 = vector.load %arg10[%c0_26, %c0_27] : memref<16x128xf32, #tpu.memory_space<vmem>>, vector<16x128xf32>
    tpu.vector_store %arg10[%c0_26, %c0_27], %38 {strides = array<i32>} : memref<16x128xf32, #tpu.memory_space<vmem>>, vector<16x128xf32>,
    return
  }
  func.func @transform_0(%arg0: i32) -> (i32, i32) {
    %c0_i32 = arith.constant 0 : i32
    %c0_i32_0 = arith.constant 0 : i32
    return %arg0, %c0_i32 : i32, i32
  }
  func.func @transform_1(%arg0: i32) -> (i32, i32) {
    %c0_i32 = arith.constant 0 : i32
    %c0_i32_0 = arith.constant 0 : i32
    %c0_i32_1 = arith.constant 0 : i32
    return %c0_i32, %c0_i32_0 : i32, i32
  }
  func.func @transform_2(%arg0: i32) -> (i32, i32) {
    %c0_i32 = arith.constant 0 : i32
    %c0_i32_0 = arith.constant 0 : i32
    %c0_i32_1 = arith.constant 0 : i32
    return %c0_i32, %c0_i32_0 : i32, i32
  }
  func.func @transform_3(%arg0: i32) -> (i32, i32) {
    %c0_i32 = arith.constant 0 : i32
    %c0_i32_0 = arith.constant 0 : i32
    %c0_i32_1 = arith.constant 0 : i32
    return %c0_i32, %c0_i32_0 : i32, i32
  }
  func.func @transform_4(%arg0: i32) -> (i32, i32) {
    %c0_i32 = arith.constant 0 : i32
    %c0_i32_0 = arith.constant 0 : i32
    %c0_i32_1 = arith.constant 0 : i32
    return %c0_i32, %c0_i32_0 : i32, i32
  }
  func.func @transform_5(%arg0: i32) -> (i32, i32) {
    %c0_i32 = arith.constant 0 : i32
    %c0_i32_0 = arith.constant 0 : i32
    %c0_i32_1 = arith.constant 0 : i32
    return %c0_i32, %c0_i32_0 : i32, i32
  }
  func.func @transform_6(%arg0: i32) -> (i32, i32) {
    %c0_i32 = arith.constant 0 : i32
    %c0_i32_0 = arith.constant 0 : i32
    %c0_i32_1 = arith.constant 0 : i32
    return %c0_i32, %c0_i32_0 : i32, i32
  }
  func.func @transform_7(%arg0: i32) -> (i32, i32) {
    %c0_i32 = arith.constant 0 : i32
    %c0_i32_0 = arith.constant 0 : i32
    %c0_i32_1 = arith.constant 0 : i32
    return %c0_i32, %c0_i32_0 : i32, i32
  }
  func.func @transform_8(%arg0: i32) -> (i32, i32) {
    %c0_i32 = arith.constant 0 : i32
    %c0_i32_0 = arith.constant 0 : i32
    %c0_i32_1 = arith.constant 0 : i32
    return %c0_i32, %c0_i32_0 : i32, i32
  }
  func.func @transform_9(%arg0: i32) -> (i32, i32) {
    %c0_i32 = arith.constant 0 : i32
    %c0_i32_0 = arith.constant 0 : i32
    return %arg0, %c0_i32 : i32, i32
  }
}

</mosaic_0001>

<llo_original>
// kernel: tpu_custom_call.1
$region0: #{tpu_custom_call.1}
  #allocation0 [shape = 'u32[]', space=smem, size = 0x4, offset = 0x4, fixed_abs, tag = 'smem constant byte address 0x4 - core index']
  #allocation1 [shape = 'u32[72,128]{1,0:T(1,128)}', space=vmem, size = 0x9000, scoped, tag = 'internal scratch']
  %s0 = inlined_call_operand.vmem [shape: f32[16,784], index: 0, kind: input, shape index: {}]
  %s1 = inlined_call_operand.hbm [shape: bf16[784,128], index: 1, kind: input, shape index: {}]
  %s2 = inlined_call_operand.vmem [shape: f32[1,128], index: 2, kind: input, shape index: {}]
  %s3 = inlined_call_operand.vmem [shape: bf16[128,64], index: 3, kind: input, shape index: {}]
  %s4 = inlined_call_operand.vmem [shape: f32[1,64], index: 4, kind: input, shape index: {}]
  %s5 = inlined_call_operand.vmem [shape: bf16[64,32], index: 5, kind: input, shape index: {}]
  %s6 = inlined_call_operand.vmem [shape: f32[1,32], index: 6, kind: input, shape index: {}]
  %s7 = inlined_call_operand.hbm [shape: f32[32,128], index: 7, kind: input, shape index: {}]
  %s8 = inlined_call_operand.vmem [shape: f32[1,128], index: 8, kind: input, shape index: {}]
  %s9 = inlined_call_operand.hbm [shape: f32[16,128], index: 9, kind: output, shape index: {}]
  %s10 = sld [smem:[#allocation0]]
  $region54: #{tpu_custom_call.1} parent=0
    _
  %s12 = ssub.s32 1, %s10
  %s13 = scalar_select 0, %s12, %s10
  $region1: #{tpu_custom_call.1} parent=0
    #allocation2 [shape = 'u8[200704]{0}', space=vmem, size = 0x31000, scoped, tag = 'input window, operand 1, single buffered']
    #allocation3 [shape = 's32[1]{0}', space=sflag, size = 0x4, scoped, tag = 'scoped memory for tpu_custom_call.1']
    #allocation4 [shape = 's32[1]{0}', space=sflag, size = 0x4, scoped, tag = 'scoped memory for tpu_custom_call.1']
    #allocation5 [shape = 'u8[16384]{0}', space=vmem, size = 0x4000, scoped, tag = 'input window, operand 7, single buffered']
    #allocation6 [shape = 's32[1]{0}', space=sflag, size = 0x4, scoped, tag = 'scoped memory for tpu_custom_call.1']
    #allocation7 [shape = 'u8[8192]{0}', space=vmem, size = 0x2000, scoped, tag = 'output window, operand 0, single buffered']
    %14 = vsyncpa [#allocation3], 0
    %15 = vsyncpa [#allocation6], 0
    %16 = vsyncpa [#allocation4], 0
    // Predicated region
    $region2: #{tpu_custom_call.1} parent=1 // pred_check
      _
    $region3: #{tpu_custom_call.1} parent=1 // pred_check_branch
      %18 = sbr.rel (0) target = $region5
    $region4: #{tpu_custom_call.1} parent=1 // pred_region
      _
    $region5: #{tpu_custom_call.1} parent=1 // pred_fallthru
      _
    // Predicated region
    $region6: #{tpu_custom_call.1} parent=1 // pred_check
      _
    $region7: #{tpu_custom_call.1} parent=1 // pred_check_branch
      %20 = sbr.rel (0) target = $region9
    $region8: #{tpu_custom_call.1} parent=1 // pred_region
      %22 = vsyncadd [#allocation3], 0
      %s23 = sshll.u32 %s1, 4
      %s24 = int_to_ptr.hbm [resolvable:$true] %s23
      %s25 = sshll.u32 [#allocation2], 4
      %s26 = int_to_ptr.vmem [resolvable:$true] %s25
      %31 = dma.hbm_to_vmem [thread:$0]  %s24, 6272, %s26, [#allocation3], 64, 64, 4
    $region9: #{tpu_custom_call.1} parent=1 // pred_fallthru
      _
    // Predicated region
    $region10: #{tpu_custom_call.1} parent=1 // pred_check
      _
    $region11: #{tpu_custom_call.1} parent=1 // pred_check_branch
      %33 = sbr.rel (0) target = $region13
    $region12: #{tpu_custom_call.1} parent=1 // pred_region
      _
    $region13: #{tpu_custom_call.1} parent=1 // pred_fallthru
      _
    // Predicated region
    $region14: #{tpu_custom_call.1} parent=1 // pred_check
      _
    $region15: #{tpu_custom_call.1} parent=1 // pred_check_branch
      %35 = sbr.rel (0) target = $region17
    $region16: #{tpu_custom_call.1} parent=1 // pred_region
      _
    $region17: #{tpu_custom_call.1} parent=1 // pred_fallthru
      _
    // Predicated region
    $region18: #{tpu_custom_call.1} parent=1 // pred_check
      _
    $region19: #{tpu_custom_call.1} parent=1 // pred_check_branch
      %37 = sbr.rel (0) target = $region21
    $region20: #{tpu_custom_call.1} parent=1 // pred_region
      _
    $region21: #{tpu_custom_call.1} parent=1 // pred_fallthru
      _
    // Predicated region
    $region22: #{tpu_custom_call.1} parent=1 // pred_check
      _
    $region23: #{tpu_custom_call.1} parent=1 // pred_check_branch
      %39 = sbr.rel (0) target = $region25
    $region24: #{tpu_custom_call.1} parent=1 // pred_region
      _
    $region25: #{tpu_custom_call.1} parent=1 // pred_fallthru
      _
    // Predicated region
    $region26: #{tpu_custom_call.1} parent=1 // pred_check
      _
    $region27: #{tpu_custom_call.1} parent=1 // pred_check_branch
      %41 = sbr.rel (0) target = $region29
    $region28: #{tpu_custom_call.1} parent=1 // pred_region
      _
    $region29: #{tpu_custom_call.1} parent=1 // pred_fallthru
      _
    // Predicated region
    $region30: #{tpu_custom_call.1} parent=1 // pred_check
      _
    $region31: #{tpu_custom_call.1} parent=1 // pred_check_branch
      %43 = sbr.rel (0) target = $region33
    $region32: #{tpu_custom_call.1} parent=1 // pred_region
      %45 = vsyncadd [#allocation6], 0
      %s46 = sshll.u32 %s7, 4
      %s47 = int_to_ptr.hbm [resolvable:$true] %s46
      %s48 = sshll.u32 [#allocation5], 4
      %s49 = int_to_ptr.vmem [resolvable:$true] %s48
      %54 = dma.hbm_to_vmem [thread:$0]  %s47, 512, %s49, [#allocation6], 128, 128, 8
    $region33: #{tpu_custom_call.1} parent=1 // pred_fallthru
      _
    // Predicated region
    $region34: #{tpu_custom_call.1} parent=1 // pred_check
      _
    $region35: #{tpu_custom_call.1} parent=1 // pred_check_branch
      %56 = sbr.rel (0) target = $region37
    $region36: #{tpu_custom_call.1} parent=1 // pred_region
      _
    $region37: #{tpu_custom_call.1} parent=1 // pred_fallthru
      _
    // Predicated region
    $region38: #{tpu_custom_call.1} parent=1 // pred_check
      _
    $region39: #{tpu_custom_call.1} parent=1 // pred_check_branch
      %58 = sbr.rel (0) target = $region41
    $region40: #{tpu_custom_call.1} parent=1 // pred_region
      %60 = dma.done [#allocation3], 6272
    $region41: #{tpu_custom_call.1} parent=1 // pred_fallthru
      _
    // Predicated region
    $region42: #{tpu_custom_call.1} parent=1 // pred_check
      _
    $region43: #{tpu_custom_call.1} parent=1 // pred_check_branch
      %62 = sbr.rel (0) target = $region45
    $region44: #{tpu_custom_call.1} parent=1 // pred_region
      %64 = dma.done [#allocation6], 512
    $region45: #{tpu_custom_call.1} parent=1 // pred_fallthru
      _
    %v66 = vld [vmem:[%s0] sm:$0xff]
    %v67 = vld [vmem:[%s0 + $0x8] sm:$0xff]
    %v68 = vld [vmem:[%s0 + $0x10] sm:$0xff]
    %v69 = vld [vmem:[%s0 + $0x18] sm:$0xff]
    %v70 = vld [vmem:[%s0 + $0x20] sm:$0xff]
    %v71 = vld [vmem:[%s0 + $0x28] sm:$0xff]
    %v72 = vld [vmem:[%s0 + $0x30] sm:$0xff]
    %v73 = vld [vmem:[%s0 + $0x38] sm:$0xff]
    %v74 = vld [vmem:[%s0 + $0x40] sm:$0xff]
    %v75 = vld [vmem:[%s0 + $0x48] sm:$0xff]
    %v76 = vld [vmem:[%s0 + $0x50] sm:$0xff]
    %v77 = vld [vmem:[%s0 + $0x58] sm:$0xff]
    %v78 = vld [vmem:[%s0 + $0x60] sm:$0xff]
    %v79 = vld [vmem:[%s0 + $0x68] sm:$0xff]
    %v80 = vpack.c.bf16 %v73, %v66
    %v81 = vpack.c.bf16 %v74, %v67
    %v82 = vpack.c.bf16 %v75, %v68
    %v83 = vpack.c.bf16 %v76, %v69
    %v84 = vpack.c.bf16 %v77, %v70
    %v85 = vpack.c.bf16 %v78, %v71
    %v86 = vpack.c.bf16 %v79, %v72
    %v87 = vld [vmem:[#allocation2] sm:$0xf]
    %v88 = vld [vmem:[#allocation2 + $0x4] sm:$0xf]
    %v89 = vld [vmem:[#allocation2 + $0x8] sm:$0xf]
    %v90 = vld [vmem:[#allocation2 + $0xc] sm:$0xf]
    %v91 = vld [vmem:[#allocation2 + $0x10] sm:$0xf]
    %v92 = vld [vmem:[#allocation2 + $0x14] sm:$0xf]
    %v93 = vld [vmem:[#allocation2 + $0x18] sm:$0xf]
    %v94 = vld [vmem:[#allocation2 + $0x1c] sm:$0xf]
    %v95 = vld [vmem:[#allocation2 + $0x20] sm:$0xf]
    %v96 = vld [vmem:[#allocation2 + $0x24] sm:$0xf]
    %v97 = vld [vmem:[#allocation2 + $0x28] sm:$0xf]
    %v98 = vld [vmem:[#allocation2 + $0x2c] sm:$0xf]
    %v99 = vld [vmem:[#allocation2 + $0x30] sm:$0xf]
    %v100 = vld [vmem:[#allocation2 + $0x34] sm:$0xf]
    %v101 = vld [vmem:[#allocation2 + $0x38] sm:$0xf]
    %v102 = vld [vmem:[#allocation2 + $0x3c] sm:$0xf]
    %v103 = vld [vmem:[#allocation2 + $0x40] sm:$0xf]
    %v104 = vld [vmem:[#allocation2 + $0x44] sm:$0xf]
    %v105 = vld [vmem:[#allocation2 + $0x48] sm:$0xf]
    %v106 = vld [vmem:[#allocation2 + $0x4c] sm:$0xf]
    %v107 = vld [vmem:[#allocation2 + $0x50] sm:$0xf]
    %v108 = vld [vmem:[#allocation2 + $0x54] sm:$0xf]
    %v109 = vld [vmem:[#allocation2 + $0x58] sm:$0xf]
    %v110 = vld [vmem:[#allocation2 + $0x5c] sm:$0xf]
    %v111 = vld [vmem:[#allocation2 + $0x60] sm:$0xf]
    %v112 = vld [vmem:[#allocation2 + $0x64] sm:$0xf]
    %v113 = vld [vmem:[#allocation2 + $0x68] sm:$0xf]
    %v114 = vld [vmem:[#allocation2 + $0x6c] sm:$0xf]
    %v115 = vld [vmem:[#allocation2 + $0x70] sm:$0xf]
    %v116 = vld [vmem:[#allocation2 + $0x74] sm:$0xf]
    %v117 = vld [vmem:[#allocation2 + $0x78] sm:$0xf]
    %v118 = vld [vmem:[#allocation2 + $0x7c] sm:$0xf]
    %v119 = vld [vmem:[#allocation2 + $0x80] sm:$0xf]
    %v120 = vld [vmem:[#allocation2 + $0x84] sm:$0xf]
    %v121 = vld [vmem:[#allocation2 + $0x88] sm:$0xf]
    %v122 = vld [vmem:[#allocation2 + $0x8c] sm:$0xf]
    %v123 = vld [vmem:[#allocation2 + $0x90] sm:$0xf]
    %v124 = vld [vmem:[#allocation2 + $0x94] sm:$0xf]
    %v125 = vld [vmem:[#allocation2 + $0x98] sm:$0xf]
    %v126 = vld [vmem:[#allocation2 + $0x9c] sm:$0xf]
    %v127 = vld [vmem:[#allocation2 + $0xa0] sm:$0xf]
    %v128 = vld [vmem:[#allocation2 + $0xa4] sm:$0xf]
    %v129 = vld [vmem:[#allocation2 + $0xa8] sm:$0xf]
    %v130 = vld [vmem:[#allocation2 + $0xac] sm:$0xf]
    %v131 = vld [vmem:[#allocation2 + $0xb0] sm:$0xf]
    %v132 = vld [vmem:[#allocation2 + $0xb4] sm:$0xf]
    %v133 = vld [vmem:[#allocation2 + $0xb8] sm:$0xf]
    %v134 = vld [vmem:[#allocation2 + $0xbc] sm:$0xf]
    %v135 = vld [vmem:[#allocation2 + $0xc0] sm:$0xf]
    %v136 = vld [vmem:[#allocation2 + $0xc4] sm:$0xf]
    %v137 = vld [vmem:[#allocation2 + $0xc8] sm:$0xf]
    %v138 = vld [vmem:[#allocation2 + $0xcc] sm:$0xf]
    %v139 = vld [vmem:[#allocation2 + $0xd0] sm:$0xf]
    %v140 = vld [vmem:[#allocation2 + $0xd4] sm:$0xf]
    %v141 = vld [vmem:[#allocation2 + $0xd8] sm:$0xf]
    %v142 = vld [vmem:[#allocation2 + $0xdc] sm:$0xf]
    %v143 = vld [vmem:[#allocation2 + $0xe0] sm:$0xf]
    %v144 = vld [vmem:[#allocation2 + $0xe4] sm:$0xf]
    %v145 = vld [vmem:[#allocation2 + $0xe8] sm:$0xf]
    %v146 = vld [vmem:[#allocation2 + $0xec] sm:$0xf]
    %v147 = vld [vmem:[#allocation2 + $0xf0] sm:$0xf]
    %v148 = vld [vmem:[#allocation2 + $0xf4] sm:$0xf]
    %v149 = vld [vmem:[#allocation2 + $0xf8] sm:$0xf]
    %v150 = vld [vmem:[#allocation2 + $0xfc] sm:$0xf]
    %v151 = vld [vmem:[#allocation2 + $0x100] sm:$0xf]
    %v152 = vld [vmem:[#allocation2 + $0x104] sm:$0xf]
    %v153 = vld [vmem:[#allocation2 + $0x108] sm:$0xf]
    %v154 = vld [vmem:[#allocation2 + $0x10c] sm:$0xf]
    %v155 = vld [vmem:[#allocation2 + $0x110] sm:$0xf]
    %v156 = vld [vmem:[#allocation2 + $0x114] sm:$0xf]
    %v157 = vld [vmem:[#allocation2 + $0x118] sm:$0xf]
    %v158 = vld [vmem:[#allocation2 + $0x11c] sm:$0xf]
    %v159 = vld [vmem:[#allocation2 + $0x120] sm:$0xf]
    %v160 = vld [vmem:[#allocation2 + $0x124] sm:$0xf]
    %v161 = vld [vmem:[#allocation2 + $0x128] sm:$0xf]
    %v162 = vld [vmem:[#allocation2 + $0x12c] sm:$0xf]
    %v163 = vld [vmem:[#allocation2 + $0x130] sm:$0xf]
    %v164 = vld [vmem:[#allocation2 + $0x134] sm:$0xf]
    %v165 = vld [vmem:[#allocation2 + $0x138] sm:$0xf]
    %v166 = vld [vmem:[#allocation2 + $0x13c] sm:$0xf]
    %v167 = vld [vmem:[#allocation2 + $0x140] sm:$0xf]
    %v168 = vld [vmem:[#allocation2 + $0x144] sm:$0xf]
    %v169 = vld [vmem:[#allocation2 + $0x148] sm:$0xf]
    %v170 = vld [vmem:[#allocation2 + $0x14c] sm:$0xf]
    %v171 = vld [vmem:[#allocation2 + $0x150] sm:$0xf]
    %v172 = vld [vmem:[#allocation2 + $0x154] sm:$0xf]
    %v173 = vld [vmem:[#allocation2 + $0x158] sm:$0xf]
    %v174 = vld [vmem:[#allocation2 + $0x15c] sm:$0xf]
    %v175 = vld [vmem:[#allocation2 + $0x160] sm:$0xf]
    %v176 = vld [vmem:[#allocation2 + $0x164] sm:$0xf]
    %v177 = vld [vmem:[#allocation2 + $0x168] sm:$0xf]
    %v178 = vld [vmem:[#allocation2 + $0x16c] sm:$0xf]
    %v179 = vld [vmem:[#allocation2 + $0x170] sm:$0xf]
    %v180 = vld [vmem:[#allocation2 + $0x174] sm:$0xf]
    %v181 = vld [vmem:[#allocation2 + $0x178] sm:$0xf]
    %v182 = vld [vmem:[#allocation2 + $0x17c] sm:$0xf]
    %v183 = vld [vmem:[#allocation2 + $0x180] sm:$0xf]
    %v184 = vld [vmem:[#allocation2 + $0x184] sm:$0xf]
    %v185 = vld [vmem:[%s2] sm:$0x1]
    %v187 = vperm.slane %v185, 0
    %v287 = vunpack.c.l.b16 %v87
    %v288 = vunpack.c.l.b16 %v88
    %v289 = vunpack.c.l.b16 %v89
    %v290 = vunpack.c.l.b16 %v90
    %v291 = vunpack.c.l.b16 %v91
    %v292 = vunpack.c.l.b16 %v92
    %v293 = vunpack.c.l.b16 %v93
    %v294 = vunpack.c.l.b16 %v94
    %v295 = vunpack.c.l.b16 %v95
    %v296 = vunpack.c.l.b16 %v96
    %v297 = vunpack.c.l.b16 %v97
    %v298 = vunpack.c.l.b16 %v98
    %v299 = vunpack.c.l.b16 %v99
    %v300 = vunpack.c.l.b16 %v100
    %v301 = vunpack.c.l.b16 %v101
    %v302 = vunpack.c.l.b16 %v102
    %v303 = vunpack.c.l.b16 %v103
    %v304 = vunpack.c.l.b16 %v104
    %v305 = vunpack.c.l.b16 %v105
    %v306 = vunpack.c.l.b16 %v106
    %v307 = vunpack.c.l.b16 %v107
    %v308 = vunpack.c.l.b16 %v108
    %v309 = vunpack.c.l.b16 %v109
    %v310 = vunpack.c.l.b16 %v110
    %v311 = vunpack.c.l.b16 %v111
    %v312 = vunpack.c.l.b16 %v112
    %v313 = vunpack.c.l.b16 %v113
    %v314 = vunpack.c.l.b16 %v114
    %v315 = vunpack.c.l.b16 %v115
    %v316 = vunpack.c.l.b16 %v116
    %v317 = vunpack.c.l.b16 %v117
    %v318 = vunpack.c.l.b16 %v118
    %v319 = vunpack.c.l.b16 %v119
    %v320 = vunpack.c.l.b16 %v120
    %v321 = vunpack.c.l.b16 %v121
    %v322 = vunpack.c.l.b16 %v122
    %v323 = vunpack.c.l.b16 %v123
    %v324 = vunpack.c.l.b16 %v124
    %v325 = vunpack.c.l.b16 %v125
    %v326 = vunpack.c.l.b16 %v126
    %v327 = vunpack.c.l.b16 %v127
    %v328 = vunpack.c.l.b16 %v128
    %v329 = vunpack.c.l.b16 %v129
    %v330 = vunpack.c.l.b16 %v130
    %v331 = vunpack.c.l.b16 %v131
    %v332 = vunpack.c.l.b16 %v132
    %v333 = vunpack.c.l.b16 %v133
    %v334 = vunpack.c.l.b16 %v134
    %v335 = vunpack.c.l.b16 %v135
    %v336 = vunpack.c.l.b16 %v136
    %v337 = vunpack.c.l.b16 %v137
    %v338 = vunpack.c.l.b16 %v138
    %v339 = vunpack.c.l.b16 %v139
    %v340 = vunpack.c.l.b16 %v140
    %v341 = vunpack.c.l.b16 %v141
    %v342 = vunpack.c.l.b16 %v142
    %v343 = vunpack.c.l.b16 %v143
    %v344 = vunpack.c.l.b16 %v144
    %v345 = vunpack.c.l.b16 %v145
    %v346 = vunpack.c.l.b16 %v146
    %v347 = vunpack.c.l.b16 %v147
    %v348 = vunpack.c.l.b16 %v148
    %v349 = vunpack.c.l.b16 %v149
    %v350 = vunpack.c.l.b16 %v150
    %v351 = vunpack.c.l.b16 %v151
    %v352 = vunpack.c.l.b16 %v152
    %v353 = vunpack.c.l.b16 %v153
    %v354 = vunpack.c.l.b16 %v154
    %v355 = vunpack.c.l.b16 %v155
    %v356 = vunpack.c.l.b16 %v156
    %v357 = vunpack.c.l.b16 %v157
    %v358 = vunpack.c.l.b16 %v158
    %v359 = vunpack.c.l.b16 %v159
    %v360 = vunpack.c.l.b16 %v160
    %v361 = vunpack.c.l.b16 %v161
    %v362 = vunpack.c.l.b16 %v162
    %v363 = vunpack.c.l.b16 %v163
    %v364 = vunpack.c.l.b16 %v164
    %v365 = vunpack.c.l.b16 %v165
    %v366 = vunpack.c.l.b16 %v166
    %v367 = vunpack.c.l.b16 %v167
    %v368 = vunpack.c.l.b16 %v168
    %v369 = vunpack.c.l.b16 %v169
    %v370 = vunpack.c.l.b16 %v170
    %v371 = vunpack.c.l.b16 %v171
    %v372 = vunpack.c.l.b16 %v172
    %v373 = vunpack.c.l.b16 %v173
    %v374 = vunpack.c.l.b16 %v174
    %v375 = vunpack.c.l.b16 %v175
    %v376 = vunpack.c.l.b16 %v176
    %v377 = vunpack.c.l.b16 %v177
    %v378 = vunpack.c.l.b16 %v178
    %v379 = vunpack.c.l.b16 %v179
    %v380 = vunpack.c.l.b16 %v180
    %v381 = vunpack.c.l.b16 %v181
    %v382 = vunpack.c.l.b16 %v182
    %v383 = vunpack.c.l.b16 %v183
    %v384 = vunpack.c.l.b16 %v184
    %v385 = vpack.c.b16 %v288, %v287
    %v386 = vpack.c.b16 %v290, %v289
    %v387 = vpack.c.b16 %v292, %v291
    %v388 = vpack.c.b16 %v294, %v293
    %v389 = vpack.c.b16 %v296, %v295
    %v390 = vpack.c.b16 %v298, %v297
    %v391 = vpack.c.b16 %v300, %v299
    %v392 = vpack.c.b16 %v302, %v301
    %v393 = vpack.c.b16 %v304, %v303
    %v394 = vpack.c.b16 %v306, %v305
    %v395 = vpack.c.b16 %v308, %v307
    %v396 = vpack.c.b16 %v310, %v309
    %v397 = vpack.c.b16 %v312, %v311
    %v398 = vpack.c.b16 %v314, %v313
    %v399 = vpack.c.b16 %v316, %v315
    %v400 = vpack.c.b16 %v318, %v317
    %v401 = vpack.c.b16 %v320, %v319
    %v402 = vpack.c.b16 %v322, %v321
    %v403 = vpack.c.b16 %v324, %v323
    %v404 = vpack.c.b16 %v326, %v325
    %v405 = vpack.c.b16 %v328, %v327
    %v406 = vpack.c.b16 %v330, %v329
    %v407 = vpack.c.b16 %v332, %v331
    %v408 = vpack.c.b16 %v334, %v333
    %v409 = vpack.c.b16 %v336, %v335
    %v410 = vpack.c.b16 %v338, %v337
    %v411 = vpack.c.b16 %v340, %v339
    %v412 = vpack.c.b16 %v342, %v341
    %v413 = vpack.c.b16 %v344, %v343
    %v414 = vpack.c.b16 %v346, %v345
    %v415 = vpack.c.b16 %v348, %v347
    %v416 = vpack.c.b16 %v350, %v349
    %v417 = vpack.c.b16 %v352, %v351
    %v418 = vpack.c.b16 %v354, %v353
    %v419 = vpack.c.b16 %v356, %v355
    %v420 = vpack.c.b16 %v358, %v357
    %v421 = vpack.c.b16 %v360, %v359
    %v422 = vpack.c.b16 %v362, %v361
    %v423 = vpack.c.b16 %v364, %v363
    %v424 = vpack.c.b16 %v366, %v365
    %v425 = vpack.c.b16 %v368, %v367
    %v426 = vpack.c.b16 %v370, %v369
    %v427 = vpack.c.b16 %v372, %v371
    %v428 = vpack.c.b16 %v374, %v373
    %v429 = vpack.c.b16 %v376, %v375
    %v430 = vpack.c.b16 %v378, %v377
    %v431 = vpack.c.b16 %v380, %v379
    %v432 = vpack.c.b16 %v382, %v381
    %v433 = vpack.c.b16 %v384, %v383
    %vm483 = vcmask 130048
    %v485 = vsel %vm483, %v86, 0
    %487 = vmatpush.bf16.msra.mxu0 %v392
    %488 = vmatpush.bf16.msra.mxu0 %v391
    %489 = vmatpush.bf16.msra.mxu0 %v390
    %490 = vmatpush.bf16.msra.mxu0 %v389
    %491 = vmatpush.bf16.msra.mxu0 %v388
    %492 = vmatpush.bf16.msra.mxu0 %v387
    %493 = vmatpush.bf16.msra.mxu0 %v386
    %494 = vmatpush.bf16.msra.mxu0 %v385
    %495 = vmatmul.bf16.gmra.mxu0 %v80
    %v496 = vpop.f32.mrf.mxu0
    %v497 = vadd.f32 %v187, %v496
    %v498 = vpop.f32.mrf.mxu0
    %v499 = vadd.f32 %v187, %v498
    %500 = vdwg.mxu0
    %501 = vmatpush.bf16.msra.mxu0 %v400
    %502 = vmatpush.bf16.msra.mxu0 %v399
    %503 = vmatpush.bf16.msra.mxu0 %v398
    %504 = vmatpush.bf16.msra.mxu0 %v397
    %505 = vmatpush.bf16.msra.mxu0 %v396
    %506 = vmatpush.bf16.msra.mxu0 %v395
    %507 = vmatpush.bf16.msra.mxu0 %v394
    %508 = vmatpush.bf16.msra.mxu0 %v393
    %509 = vmatmul.bf16.gmra.mxu0 %v81
    %v510 = vpop.f32.mrf.mxu0
    %v511 = vadd.f32 %v497, %v510
    %v512 = vpop.f32.mrf.mxu0
    %v513 = vadd.f32 %v499, %v512
    %514 = vdwg.mxu0
    %515 = vmatpush.bf16.msra.mxu0 %v408
    %516 = vmatpush.bf16.msra.mxu0 %v407
    %517 = vmatpush.bf16.msra.mxu0 %v406
    %518 = vmatpush.bf16.msra.mxu0 %v405
    %519 = vmatpush.bf16.msra.mxu0 %v404
    %520 = vmatpush.bf16.msra.mxu0 %v403
    %521 = vmatpush.bf16.msra.mxu0 %v402
    %522 = vmatpush.bf16.msra.mxu0 %v401
    %523 = vmatmul.bf16.gmra.mxu0 %v82
    %v524 = vpop.f32.mrf.mxu0
    %v525 = vadd.f32 %v511, %v524
    %v526 = vpop.f32.mrf.mxu0
    %v527 = vadd.f32 %v513, %v526
    %528 = vdwg.mxu0
    %529 = vmatpush.bf16.msra.mxu0 %v416
    %530 = vmatpush.bf16.msra.mxu0 %v415
    %531 = vmatpush.bf16.msra.mxu0 %v414
    %532 = vmatpush.bf16.msra.mxu0 %v413
    %533 = vmatpush.bf16.msra.mxu0 %v412
    %534 = vmatpush.bf16.msra.mxu0 %v411
    %535 = vmatpush.bf16.msra.mxu0 %v410
    %536 = vmatpush.bf16.msra.mxu0 %v409
    %537 = vmatmul.bf16.gmra.mxu0 %v83
    %v538 = vpop.f32.mrf.mxu0
    %v539 = vadd.f32 %v525, %v538
    %v540 = vpop.f32.mrf.mxu0
    %v541 = vadd.f32 %v527, %v540
    %542 = vdwg.mxu0
    %543 = vmatpush.bf16.msra.mxu0 %v424
    %544 = vmatpush.bf16.msra.mxu0 %v423
    %545 = vmatpush.bf16.msra.mxu0 %v422
    %546 = vmatpush.bf16.msra.mxu0 %v421
    %547 = vmatpush.bf16.msra.mxu0 %v420
    %548 = vmatpush.bf16.msra.mxu0 %v419
    %549 = vmatpush.bf16.msra.mxu0 %v418
    %550 = vmatpush.bf16.msra.mxu0 %v417
    %551 = vmatmul.bf16.gmra.mxu0 %v84
    %v552 = vpop.f32.mrf.mxu0
    %v553 = vadd.f32 %v539, %v552
    %v554 = vpop.f32.mrf.mxu0
    %v555 = vadd.f32 %v541, %v554
    %556 = vdwg.mxu0
    %557 = vmatpush.bf16.msra.mxu0 %v432
    %558 = vmatpush.bf16.msra.mxu0 %v431
    %559 = vmatpush.bf16.msra.mxu0 %v430
    %560 = vmatpush.bf16.msra.mxu0 %v429
    %561 = vmatpush.bf16.msra.mxu0 %v428
    %562 = vmatpush.bf16.msra.mxu0 %v427
    %563 = vmatpush.bf16.msra.mxu0 %v426
    %564 = vmatpush.bf16.msra.mxu0 %v425
    %565 = vmatmul.bf16.gmra.mxu0 %v85
    %v566 = vpop.f32.mrf.mxu0
    %v567 = vadd.f32 %v553, %v566
    %v568 = vpop.f32.mrf.mxu0
    %v569 = vadd.f32 %v555, %v568
    %570 = vdwg.mxu0
    %571 = vmatpush.bf16.msra.mxu0 0
    %572 = vmatpush.bf16.msra.mxu0 0
    %573 = vmatpush.bf16.msra.mxu0 0
    %574 = vmatpush.bf16.msra.mxu0 0
    %575 = vmatpush.bf16.msra.mxu0 0
    %576 = vmatpush.bf16.msra.mxu0 0
    %577 = vmatpush.bf16.msra.mxu0 0
    %578 = vmatpush.bf16.msra.mxu0 %v433
    %579 = vmatmul.bf16.gmra.mxu0 %v485
    %v580 = vpop.f32.mrf.mxu0
    %v581 = vadd.f32 %v567, %v580
    %v582 = vpop.f32.mrf.mxu0
    %v583 = vadd.f32 %v569, %v582
    %584 = vdwg.mxu0
    %vm585 = vcmp.gt.f32.partialorder %v581, 0.0
    %vm586 = vcmp.gt.f32.partialorder %v583, 0.0
    %v587 = vmul.f32 %v581, 0.2
    %v588 = vmul.f32 %v583, 0.2
    %v589 = vsel %vm585, %v581, %v587
    %v590 = vsel %vm586, %v583, %v588
    %v591 = vpack.c.bf16 %v590, %v589
    %v592 = vld [vmem:[%s3] sm:$0xf]
    %v593 = vld [vmem:[%s3 + $0x4] sm:$0xf]
    %v594 = vld [vmem:[%s3 + $0x8] sm:$0xf]
    %v595 = vld [vmem:[%s3 + $0xc] sm:$0xf]
    %v596 = vld [vmem:[%s3 + $0x10] sm:$0xf]
    %v597 = vld [vmem:[%s3 + $0x14] sm:$0xf]
    %v598 = vld [vmem:[%s3 + $0x18] sm:$0xf]
    %v599 = vld [vmem:[%s3 + $0x1c] sm:$0xf]
    %v600 = vld [vmem:[%s3 + $0x20] sm:$0xf]
    %v601 = vld [vmem:[%s3 + $0x24] sm:$0xf]
    %v602 = vld [vmem:[%s3 + $0x28] sm:$0xf]
    %v603 = vld [vmem:[%s3 + $0x2c] sm:$0xf]
    %v604 = vld [vmem:[%s3 + $0x30] sm:$0xf]
    %v605 = vld [vmem:[%s3 + $0x34] sm:$0xf]
    %v606 = vld [vmem:[%s3 + $0x38] sm:$0xf]
    %v607 = vld [vmem:[%s3 + $0x3c] sm:$0xf]
    %v608 = vld [vmem:[%s4] sm:$0x1]
    %v610 = vperm.slane %v608, 0
    %v628 = vunpack.c.l.b16 %v592
    %v629 = vunpack.c.l.b16 %v593
    %v630 = vunpack.c.l.b16 %v594
    %v631 = vunpack.c.l.b16 %v595
    %v632 = vunpack.c.l.b16 %v596
    %v633 = vunpack.c.l.b16 %v597
    %v634 = vunpack.c.l.b16 %v598
    %v635 = vunpack.c.l.b16 %v599
    %v636 = vunpack.c.l.b16 %v600
    %v637 = vunpack.c.l.b16 %v601
    %v638 = vunpack.c.l.b16 %v602
    %v639 = vunpack.c.l.b16 %v603
    %v640 = vunpack.c.l.b16 %v604
    %v641 = vunpack.c.l.b16 %v605
    %v642 = vunpack.c.l.b16 %v606
    %v643 = vunpack.c.l.b16 %v607
    %v644 = vpack.c.b16 %v629, %v628
    %v645 = vpack.c.b16 %v631, %v630
    %v646 = vpack.c.b16 %v633, %v632
    %v647 = vpack.c.b16 %v635, %v634
    %v648 = vpack.c.b16 %v637, %v636
    %v649 = vpack.c.b16 %v639, %v638
    %v650 = vpack.c.b16 %v641, %v640
    %v651 = vpack.c.b16 %v643, %v642
    %660 = vmatpush.bf16.msra.mxu0 %v651
    %661 = vmatpush.bf16.msra.mxu0 %v650
    %662 = vmatpush.bf16.msra.mxu0 %v649
    %663 = vmatpush.bf16.msra.mxu0 %v648
    %664 = vmatpush.bf16.msra.mxu0 %v647
    %665 = vmatpush.bf16.msra.mxu0 %v646
    %666 = vmatpush.bf16.msra.mxu0 %v645
    %667 = vmatpush.bf16.msra.mxu0 %v644
    %668 = vmatmul.bf16.gmra.mxu0 %v591
    %v669 = vpop.f32.mrf.mxu0
    %v670 = vadd.f32 %v610, %v669
    %v671 = vpop.f32.mrf.mxu0
    %v672 = vadd.f32 %v610, %v671
    %673 = vdwg.mxu0
    %vm674 = vcmp.gt.f32.partialorder %v670, 0.0
    %vm675 = vcmp.gt.f32.partialorder %v672, 0.0
    %v676 = vmul.f32 %v670, 0.2
    %v677 = vmul.f32 %v672, 0.2
    %v678 = vsel %vm674, %v670, %v676
    %v679 = vsel %vm675, %v672, %v677
    %v680 = vpack.c.bf16 %v679, %v678
    %v681 = vld [vmem:[%s5] sm:$0xf]
    %v682 = vld [vmem:[%s5 + $0x4] sm:$0xf]
    %v683 = vld [vmem:[%s5 + $0x8] sm:$0xf]
    %v684 = vld [vmem:[%s5 + $0xc] sm:$0xf]
    %v685 = vld [vmem:[%s5 + $0x10] sm:$0xf]
    %v686 = vld [vmem:[%s5 + $0x14] sm:$0xf]
    %v687 = vld [vmem:[%s5 + $0x18] sm:$0xf]
    %v688 = vld [vmem:[%s5 + $0x1c] sm:$0xf]
    %v689 = vld [vmem:[%s6] sm:$0x1]
    %v691 = vperm.slane %v689, 0
    %v701 = vunpack.c.l.b16 %v681
    %v702 = vunpack.c.l.b16 %v682
    %v703 = vunpack.c.l.b16 %v683
    %v704 = vunpack.c.l.b16 %v684
    %v705 = vunpack.c.l.b16 %v685
    %v706 = vunpack.c.l.b16 %v686
    %v707 = vunpack.c.l.b16 %v687
    %v708 = vunpack.c.l.b16 %v688
    %v709 = vpack.c.b16 %v702, %v701
    %v710 = vpack.c.b16 %v704, %v703
    %v711 = vpack.c.b16 %v706, %v705
    %v712 = vpack.c.b16 %v708, %v707
    %vm717 = vcmask 523264
    %v719 = vsel %vm717, %v680, 0
    %721 = vmatpush.bf16.msra.mxu0 0
    %722 = vmatpush.bf16.msra.mxu0 0
    %723 = vmatpush.bf16.msra.mxu0 0
    %724 = vmatpush.bf16.msra.mxu0 0
    %725 = vmatpush.bf16.msra.mxu0 %v712
    %726 = vmatpush.bf16.msra.mxu0 %v711
    %727 = vmatpush.bf16.msra.mxu0 %v710
    %728 = vmatpush.bf16.msra.mxu0 %v709
    %729 = vmatmul.bf16.gmra.mxu0 %v719
    %v730 = vpop.f32.mrf.mxu0
    %v731 = vadd.f32 %v691, %v730
    %v732 = vpop.f32.mrf.mxu0
    %v733 = vadd.f32 %v691, %v732
    %734 = vdwg.mxu0
    %vm735 = vcmp.gt.f32.partialorder %v731, 0.0
    %vm736 = vcmp.gt.f32.partialorder %v733, 0.0
    %v737 = vmul.f32 %v731, 0.2
    %v738 = vmul.f32 %v733, 0.2
    %v739 = vsel %vm735, %v731, %v737
    %v740 = vsel %vm736, %v733, %v738
    %v741 = vld [vmem:[#allocation5] sm:$0xff]
    %v742 = vld [vmem:[#allocation5 + $0x8] sm:$0xff]
    %v743 = vld [vmem:[#allocation5 + $0x10] sm:$0xff]
    %v744 = vld [vmem:[#allocation5 + $0x18] sm:$0xff]
    %v745 = vld [vmem:[%s8] sm:$0x1]
    %v747 = vperm.slane %v745, 0
    %vm749 = vcmask 261120
    %v751 = vsel %vm749, %v739, 0
    %v754 = vsel %vm749, %v740, 0
    %756 = vmatpush.msra.mxu0 0.0
    %757 = vmatpush.msra.mxu0 0.0
    %758 = vmatpush.msra.mxu0 0.0
    %759 = vmatpush.msra.mxu0 0.0
    %760 = vmatpush.msra.mxu0 0.0
    %761 = vmatpush.msra.mxu0 0.0
    %762 = vmatpush.msra.mxu0 0.0
    %763 = vmatpush.msra.mxu0 0.0
    %764 = vmatpush.msra.mxu0 0.0
    %765 = vmatpush.msra.mxu0 0.0
    %766 = vmatpush.msra.mxu0 0.0
    %767 = vmatpush.msra.mxu0 0.0
    %768 = vmatpush.msra.mxu0 %v744
    %769 = vmatpush.msra.mxu0 %v743
    %770 = vmatpush.msra.mxu0 %v742
    %771 = vmatpush.msra.mxu0 %v741
    %772 = vmatmul.f32.gmra.mxu0 %v751
    %v773 = vpop.f32.mrf.mxu0
    %v774 = vadd.f32 %v747, %v773
    %775 = vmatmul.f32.gmra.mxu0 %v754
    %v776 = vpop.f32.mrf.mxu0
    %v777 = vadd.f32 %v747, %v776
    %778 = vdwg.mxu0
    %779 = vst [vmem:[#allocation7] sm:$0xff] %v774
    %780 = vst [vmem:[#allocation7 + $0x8] sm:$0xff] %v777
    // Predicated region
    $region46: #{tpu_custom_call.1} parent=1 // pred_check
      _
    $region47: #{tpu_custom_call.1} parent=1 // pred_check_branch
      %782 = sbr.rel (0) target = $region49
    $region48: #{tpu_custom_call.1} parent=1 // pred_region
      %784 = vsyncadd [#allocation4], 0
      %s785 = sshll.u32 [#allocation7], 4
      %s786 = int_to_ptr.vmem [resolvable:$true] %s785
      %s787 = sshll.u32 %s9, 4
      %s788 = int_to_ptr.hbm [resolvable:$true] %s787
      %793 = dma.vmem_to_hbm [thread:$0]  %s786, 256, %s788, [#allocation4], 128, 128, 8
    $region49: #{tpu_custom_call.1} parent=1 // pred_fallthru
      _
    // Predicated region
    $region50: #{tpu_custom_call.1} parent=1 // pred_check
      _
    $region51: #{tpu_custom_call.1} parent=1 // pred_check_branch
      %795 = sbr.rel (0) target = $region53
    $region52: #{tpu_custom_call.1} parent=1 // pred_region
      %797 = dma.done [#allocation4], 256
    $region53: #{tpu_custom_call.1} parent=1 // pred_fallthru
      _
    %798 = vsyncpa [#allocation3], 1
    %799 = vsyncpa [#allocation6], 1
    %800 = vsyncpa [#allocation4], 1

</llo_original>
